<compile_context>
chip_gen: v7x
topology: tpu7x:2x2x1
jax: 0.10.0
libtpu: 0.0.40
codegen_flags: <defaults>
</compile_context>

<pallas_src>
import numpy as np
import jax
import jax.numpy as jnp
from jax.experimental import pallas as pl
from jax.experimental.pallas import tpu as pltpu

BN_EPS = 1e-5
MA_KERNEL = 25


# ---------------------------------------------------------------------------
# Host-side constant / parameter preparation (runs once per model + graph).
# ---------------------------------------------------------------------------

def _moving_avg_matrix(C: int, k: int = MA_KERNEL) -> np.ndarray:
    """M such that x @ M == moving_avg(kernel=k, stride=1) along the channel
    (time) axis with (k-1)//2 replicate-padded samples per side, matching the
    torch `moving_avg` module applied to x.transpose(0, 1)."""
    pad = (k - 1) // 2
    M = np.zeros((C, C), dtype=np.float32)
    for c in range(C):
        for p in range(c, c + k):
            j = min(max(p - pad, 0), C - 1)
            M[j, c] += 1.0 / k
    return M


def mean_aggregation_matrix(edge_index, num_nodes: int) -> np.ndarray:
    """Dense row-normalized adjacency reproducing PyG SAGEConv mean aggregation
    (duplicate edges weighted, isolated nodes aggregate to 0)."""
    ei = np.asarray(edge_index)
    src, dst = ei[0], ei[1]
    adj = np.zeros((num_nodes, num_nodes), dtype=np.float32)
    np.add.at(adj, (dst, src), 1.0)
    deg = adj.sum(axis=1, keepdims=True)
    return (adj / np.maximum(deg, 1.0)).astype(np.float32)


def _round_up(n: int, m: int) -> int:
    return ((n + m - 1) // m) * m


def _slab_layout(N: int, C: int, O: int):
    """Row offsets (16-row aligned, bf16 sublane tile) of each constant inside
    the packed [rows, width] slab."""
    C1 = C + 1
    rA = 0
    rW1L = rA + _round_up(N, 16)
    rW1R = rW1L + _round_up(C1, 16)
    rW2L = rW1R + _round_up(C1, 16)
    rW2R = rW2L + _round_up(2 * O, 16)
    rows = rW2R + _round_up(2 * O, 16)
    width = _round_up(max(N, 4 * O, 2 * O), 128)
    return dict(rA=rA, rW1L=rW1L, rW1R=rW1R, rW2L=rW2L, rW2R=rW2R,
                rows=rows, width=width)


def pack_constants(flat_params, edge_index, num_nodes: int, in_channels: int):
    """Fold eval-mode BatchNorm affines, all SAGE biases and the series
    decomposition into one bf16 constant slab.

    Slab sections (each 16-row aligned, lane offset 0):
      A   [N, N]      row-normalized mean aggregation
      W1L [C+1, 4O]   lin_l of conv1/conv3 of both blocks, decomposition
                      projector folded in; bias row is zero.
      W1R [C+1, 4O]   lin_r of conv1/conv3 of both blocks; bias row carries
                      the folded BN biases, with the stage-2 biases pre-added
                      onto the conv3 (residual) columns.
      W2L [2O, 2O]    block-diagonal lin_l of conv2 of both blocks.
      W2R [2O, 2O]    block-diagonal lin_r of conv2 of both blocks.
    Column layout of 4O-wide sections: [c1_seasonal | c1_trend | c3_seasonal | c3_trend].
    """
    assert len(flat_params) == 30
    C = in_channels
    C1 = C + 1

    def fold_block(p):
        (wl1, wr1, b1, s1, t1,
         wl2, wr2, b2, s2, t2,
         wl3, wr3, b3, s3, t3) = [np.asarray(a, dtype=np.float32) for a in p]
        return dict(
            wl1=wl1 * s1, wr1=wr1 * s1, b1=b1 * s1 + t1,
            wl2=wl2 * s2, wr2=wr2 * s2, b2=b2 * s2 + t2,
            wl3=wl3 * s3, wr3=wr3 * s3, b3=b3 * s3 + t3,
        )

    fs = fold_block(flat_params[:15])     # seasonal block (sage1)
    ft = fold_block(flat_params[15:])     # trend block (sage2)
    O = fs["wl1"].shape[1]

    # series_decomp folded into stage 1: trend = x@M, seasonal = x@(I-M)
    M = _moving_avg_matrix(C)
    S = np.eye(C, dtype=np.float32) - M

    W1L = np.zeros((C1, 4 * O), np.float32)
    W1L[:C, 0 * O:1 * O] = S @ fs["wl1"]
    W1L[:C, 1 * O:2 * O] = M @ ft["wl1"]
    W1L[:C, 2 * O:3 * O] = S @ fs["wl3"]
    W1L[:C, 3 * O:4 * O] = M @ ft["wl3"]

    W1R = np.zeros((C1, 4 * O), np.float32)
    W1R[:C, 0 * O:1 * O] = S @ fs["wr1"]
    W1R[:C, 1 * O:2 * O] = M @ ft["wr1"]
    W1R[:C, 2 * O:3 * O] = S @ fs["wr3"]
    W1R[:C, 3 * O:4 * O] = M @ ft["wr3"]
    # bias row (multiplied by the appended constant-1 column of x):
    W1R[C, 0 * O:1 * O] = fs["b1"][0]
    W1R[C, 1 * O:2 * O] = ft["b1"][0]
    # stage-2 biases pre-added onto the residual (conv3) branch -> stage 2
    # needs no bias operand: relu((s2) + (xr + b2)) == relu((s2 + b2) + xr).
    W1R[C, 2 * O:3 * O] = fs["b3"][0] + fs["b2"][0]
    W1R[C, 3 * O:4 * O] = ft["b3"][0] + ft["b2"][0]

    W2L = np.zeros((2 * O, 2 * O), np.float32)
    W2L[:O, :O] = fs["wl2"]
    W2L[O:, O:] = ft["wl2"]
    W2R = np.zeros((2 * O, 2 * O), np.float32)
    W2R[:O, :O] = fs["wr2"]
    W2R[O:, O:] = ft["wr2"]

    A = mean_aggregation_matrix(edge_index, num_nodes)

    lay = _slab_layout(num_nodes, C, O)
    slab = np.zeros((lay["rows"], lay["width"]), np.float32)
    slab[lay["rA"]:lay["rA"] + num_nodes, :num_nodes] = A
    slab[lay["rW1L"]:lay["rW1L"] + C1, :4 * O] = W1L
    slab[lay["rW1R"]:lay["rW1R"] + C1, :4 * O] = W1R
    slab[lay["rW2L"]:lay["rW2L"] + 2 * O, :2 * O] = W2L
    slab[lay["rW2R"]:lay["rW2R"] + 2 * O, :2 * O] = W2R
    return jnp.asarray(slab, dtype=jnp.bfloat16), O


# ---------------------------------------------------------------------------
# Pallas kernel: one batch window per grid step; constants stay resident.
# ---------------------------------------------------------------------------

def _make_kernel(N: int, C1: int, O: int, lay):
    rA, rW1L, rW1R = lay["rA"], lay["rW1L"], lay["rW1R"]
    rW2L, rW2R = lay["rW2L"], lay["rW2R"]
    f32 = jnp.float32

    def kernel(x_ref, c_ref, o_ref):
        x1 = x_ref[0]                                    # [N, C+1] bf16 (ones col)
        A = c_ref[rA:rA + N, :N]                         # [N, N]
        W1L = c_ref[rW1L:rW1L + C1, :4 * O]              # [C+1, 4O]
        W1R = c_ref[rW1R:rW1R + C1, :4 * O]              # [C+1, 4O] (bias row)
        W2L = c_ref[rW2L:rW2L + 2 * O, :2 * O]           # [2O, 2O]
        W2R = c_ref[rW2R:rW2R + 2 * O, :2 * O]           # [2O, 2O]

        # Stage 1: series_decomp + conv1/conv3 + eval BN of BOTH blocks, all
        # folded host-side.  A@(x@W) is reassociated to (A@x)@W so one
        # aggregation is shared across conv1/conv3 and seasonal/trend.
        ax1 = jnp.dot(A, x1, preferred_element_type=f32).astype(jnp.bfloat16)
        s1 = (jnp.dot(ax1, W1L, preferred_element_type=f32)
              + jnp.dot(x1, W1R, preferred_element_type=f32))        # [N, 4O]
        h1 = jnp.maximum(s1[:, :2 * O], 0.0).astype(jnp.bfloat16)    # relu(conv1)
        xr = s1[:, 2 * O:]                                           # conv3 residual (+b2)
        # TODO(synk): dropout is identity in eval mode; training-mode dropout
        # and batch-statistic BatchNorm are intentionally not reproduced.

        # Stage 2: conv2 + eval BN of both blocks via block-diagonal weights.
        ah1 = jnp.dot(A, h1, preferred_element_type=f32).astype(jnp.bfloat16)
        s2 = (jnp.dot(ah1, W2L, preferred_element_type=f32)
              + jnp.dot(h1, W2R, preferred_element_type=f32))        # [N, 2O]
        out2 = jnp.maximum(s2 + xr, 0.0)                             # residual + relu

        # seasonal_output + trend_output
        o_ref[0] = (out2[:, :O] + out2[:, O:]).astype(o_ref.dtype)

    return kernel


def make_water_graph_forward(N: int, C: int, O: int):
    lay = _slab_layout(N, C, O)
    C1 = C + 1
    kernel = _make_kernel(N, C1, O, lay)

    @jax.jit
    def forward(x, consts):
        squeeze_batch = (x.ndim == 2)
        xb = x[None] if squeeze_batch else x             # [B, N, C]
        B = xb.shape[0]
        ones = jnp.ones((B, N, 1), xb.dtype)
        x1 = jnp.concatenate([xb, ones], axis=-1).astype(jnp.bfloat16)  # [B,N,C+1]

        out = pl.pallas_call(
            kernel,
            grid=(B,),
            in_specs=[
                pl.BlockSpec((1, N, C1), lambda b: (b, 0, 0)),
                pl.BlockSpec((lay["rows"], lay["width"]), lambda b: (0, 0)),
            ],
            out_specs=pl.BlockSpec((1, N, O), lambda b: (b, 0, 0)),
            out_shape=jax.ShapeDtypeStruct((B, N, O), jnp.float32),
            compiler_params=pltpu.CompilerParams(
                dimension_semantics=("parallel",)),
        )(x1, consts)

        # torch .squeeze(-1): only drops the last dim if it equals 1
        if O == 1:
            out = out[..., 0]
        return out[0] if squeeze_batch else out

    return forward


# ---------------------------------------------------------------------------
# Parameter init (matches torch reset_parameters semantics) and a pure-JAX
# unfused f32 reference for validation.
# ---------------------------------------------------------------------------

def init_params(key, in_channels, out_channels):
    assert in_channels != out_channels, "conv3/norm3 residual path assumed active"

    def linear_w(k, fin, fout):
        bound = 1.0 / np.sqrt(fin)
        return jax.random.uniform(k, (fin, fout), jnp.float32, -bound, bound)

    def sage_params(k, fin, fout):
        k1, k2, k3 = jax.random.split(k, 3)
        wl = linear_w(k1, fin, fout)                 # lin_l (aggregated messages)
        wr = linear_w(k2, fin, fout)                 # lin_r (root weight)
        bound = 1.0 / np.sqrt(fin)
        b = jax.random.uniform(k3, (1, fout), jnp.float32, -bound, bound)
        return [wl, wr, b]

    def bn_params(fout):
        gamma = jnp.ones((1, fout), jnp.float32)
        beta = jnp.zeros((1, fout), jnp.float32)
        running_mean = jnp.zeros((1, fout), jnp.float32)
        running_var = jnp.ones((1, fout), jnp.float32)
        scale = gamma / jnp.sqrt(running_var + BN_EPS)
        shift = beta - running_mean * scale
        return [scale, shift]

    def block_params(k, fin, fout):
        k1, k2, k3 = jax.random.split(k, 3)
        p = []
        p += sage_params(k1, fin, fout) + bn_params(fout)   # conv1 / norm1
        p += sage_params(k2, fout, fout) + bn_params(fout)  # conv2 / norm2
        p += sage_params(k3, fin, fout) + bn_params(fout)   # conv3 / norm3
        return p

    k1, k2 = jax.random.split(key)
    return block_params(k1, in_channels, out_channels) + \
           block_params(k2, in_channels, out_channels)


def reference_forward(x, A, flat_params):
    """Unfused pure-JAX eval-mode reference (validation only)."""
    C = x.shape[1]
    M = jnp.asarray(_moving_avg_matrix(C))
    hp = jax.lax.Precision.HIGHEST
    trend = jnp.dot(x, M, precision=hp)
    seasonal = x - trend

    def sage(h, wl, wr, bias):
        return (jnp.dot(jnp.dot(A, h, precision=hp), wl, precision=hp)
                + jnp.dot(h, wr, precision=hp) + bias)

    def block(xin, p):
        (wl1, wr1, b1, s1, t1,
         wl2, wr2, b2, s2, t2,
         wl3, wr3, b3, s3, t3) = p
        h = jnp.maximum(sage(xin, wl1, wr1, b1) * s1 + t1, 0.0)
        h = sage(h, wl2, wr2, b2) * s2 + t2
        xr = sage(xin, wl3, wr3, b3) * s3 + t3
        return jnp.maximum(h + xr, 0.0)

    out = block(seasonal, flat_params[:15]) + block(trend, flat_params[15:])
    return out[:, 0] if out.shape[1] == 1 else out


if __name__ == "__main__":
    key = jax.random.PRNGKey(0)
    B = 8                # inference windows batched into one pallas_call
    N = 16               # graph nodes
    in_channels = 32     # per-node time-series length (features)
    out_channels = 4
    num_edges = 48

    kx, ke, kp = jax.random.split(key, 3)
    xb = jax.random.normal(kx, (B, N, in_channels), jnp.float32)
    edge_index = jax.random.randint(ke, (2, num_edges), 0, N, dtype=jnp.int32)
    flat_params = init_params(kp, in_channels, out_channels)

    # One-time host-side prep for the fixed graph / frozen weights.
    consts, O = pack_constants(flat_params, np.asarray(edge_index), N, in_channels)
    forward = make_water_graph_forward(N, in_channels, O)

    # Batched path (B windows, one pallas_call, constants DMA'd once).
    out_b = forward(xb, consts)
    jax.block_until_ready(out_b)
    assert out_b.shape == (B, N, out_channels)
    assert bool(jnp.all(jnp.isfinite(out_b)))

    # Single-window path (original module signature).
    out_1 = forward(xb[0], consts)
    jax.block_until_ready(out_1)
    assert out_1.shape == (N, out_channels)

    # Validate the fused/folded bf16 kernel against the f32 unfused reference.
    A_f32 = jnp.asarray(mean_aggregation_matrix(np.asarray(edge_index), N))
    ref_b = jax.vmap(lambda xi: reference_forward(xi, A_f32, flat_params))(xb)
    np.testing.assert_allclose(np.asarray(out_b), np.asarray(ref_b),
                               rtol=5e-2, atol=5e-2)
    np.testing.assert_allclose(np.asarray(out_1), np.asarray(ref_b[0]),
                               rtol=5e-2, atol=5e-2)
    print("KERNEL_OK")
</pallas_src>

<mosaic_0001>
module attributes {stable_mosaic.version = 11 : i64} {
  func.func @kernel(%arg0: i32, %arg1: memref<1x16x33xbf16, #tpu.memory_space<vmem>>, %arg2: memref<144x128xbf16, #tpu.memory_space<vmem>>, %arg3: memref<1x16x4xf32, #tpu.memory_space<vmem>>) attributes {dimension_semantics = [#tpu.dimension_semantics<parallel>], iteration_bounds = array<i64: 8>, scalar_prefetch = 0 : i64, scratch_operands = 0 : i64, tpu.core_type = #tpu.core_type<tc>, window_params = [{transform_indices = @transform_0, window_bounds = array<i64: 1, 16, 33>}, {pipeline_mode = #tpu.pipeline_mode<synchronous>, transform_indices = @transform_1, window_bounds = array<i64: 144, 128>}, {transform_indices = @transform_2, window_bounds = array<i64: 1, 16, 4>}]} {
    %c0 = arith.constant 0 : index
    %c0_0 = arith.constant 0 : index
    %c0_1 = arith.constant 0 : index
    %0 = vector.load %arg1[%c0, %c0_0, %c0_1] : memref<1x16x33xbf16, #tpu.memory_space<vmem>>, vector<1x16x33xbf16>
    %1 = vector.shape_cast %0 : vector<1x16x33xbf16> to vector<16x33xbf16>
    %c0_2 = arith.constant 0 : index
    %c0_3 = arith.constant 0 : index
    %2 = vector.load %arg2[%c0_2, %c0_3] : memref<144x128xbf16, #tpu.memory_space<vmem>>, vector<16x16xbf16>
    %c16 = arith.constant 16 : index
    %c0_4 = arith.constant 0 : index
    %3 = vector.load %arg2[%c16, %c0_4] : memref<144x128xbf16, #tpu.memory_space<vmem>>, vector<33x16xbf16>
    %c64 = arith.constant 64 : index
    %c0_5 = arith.constant 0 : index
    %4 = vector.load %arg2[%c64, %c0_5] : memref<144x128xbf16, #tpu.memory_space<vmem>>, vector<33x16xbf16>
    %c112 = arith.constant 112 : index
    %c0_6 = arith.constant 0 : index
    %5 = vector.load %arg2[%c112, %c0_6] : memref<144x128xbf16, #tpu.memory_space<vmem>>, vector<8x8xbf16>
    %c128 = arith.constant 128 : index
    %c0_7 = arith.constant 0 : index
    %6 = vector.load %arg2[%c128, %c0_7] : memref<144x128xbf16, #tpu.memory_space<vmem>>, vector<8x8xbf16>
    %cst = arith.constant dense<0.000000e+00> : vector<16x33xf32>
    %7 = tpu.matmul %2, %1, %cst {dimension_numbers = #tpu.dot_dimension_numbers<[1], [0], [0], [1], [0, 0, 1, 1], [], []>} : vector<16x16xbf16>, vector<16x33xbf16>, vector<16x33xf32> -> vector<16x33xf32>
    %8 = arith.truncf %7 : vector<16x33xf32> to vector<16x33xbf16>
    %cst_8 = arith.constant dense<0.000000e+00> : vector<16x16xf32>
    %9 = tpu.matmul %8, %3, %cst_8 {dimension_numbers = #tpu.dot_dimension_numbers<[1], [0], [0], [1], [0, 0, 1, 1], [], []>} : vector<16x33xbf16>, vector<33x16xbf16>, vector<16x16xf32> -> vector<16x16xf32>
    %cst_9 = arith.constant dense<0.000000e+00> : vector<16x16xf32>
    %10 = tpu.matmul %1, %4, %cst_9 {dimension_numbers = #tpu.dot_dimension_numbers<[1], [0], [0], [1], [0, 0, 1, 1], [], []>} : vector<16x33xbf16>, vector<33x16xbf16>, vector<16x16xf32> -> vector<16x16xf32>
    %11 = arith.addf %9, %10 : vector<16x16xf32>
    %12 = vector.extract_strided_slice %11 {offsets = [0, 0], sizes = [16, 8], strides = [1, 1]} : vector<16x16xf32> to vector<16x8xf32>
    %cst_10 = arith.constant 0.000000e+00 : f32
    %13 = vector.broadcast %cst_10 : f32 to vector<16x8xf32>
    %14 = arith.maximumf %12, %13 : vector<16x8xf32>
    %15 = arith.truncf %14 : vector<16x8xf32> to vector<16x8xbf16>
    %16 = vector.extract_strided_slice %11 {offsets = [0, 8], sizes = [16, 8], strides = [1, 1]} : vector<16x16xf32> to vector<16x8xf32>
    %cst_11 = arith.constant dense<0.000000e+00> : vector<16x8xf32>
    %17 = tpu.matmul %2, %15, %cst_11 {dimension_numbers = #tpu.dot_dimension_numbers<[1], [0], [0], [1], [0, 0, 1, 1], [], []>} : vector<16x16xbf16>, vector<16x8xbf16>, vector<16x8xf32> -> vector<16x8xf32>
    %18 = arith.truncf %17 : vector<16x8xf32> to vector<16x8xbf16>
    %cst_12 = arith.constant dense<0.000000e+00> : vector<16x8xf32>
    %19 = tpu.matmul %18, %5, %cst_12 {dimension_numbers = #tpu.dot_dimension_numbers<[1], [0], [0], [1], [0, 0, 1, 1], [], []>} : vector<16x8xbf16>, vector<8x8xbf16>, vector<16x8xf32> -> vector<16x8xf32>
    %cst_13 = arith.constant dense<0.000000e+00> : vector<16x8xf32>
    %20 = tpu.matmul %15, %6, %cst_13 {dimension_numbers = #tpu.dot_dimension_numbers<[1], [0], [0], [1], [0, 0, 1, 1], [], []>} : vector<16x8xbf16>, vector<8x8xbf16>, vector<16x8xf32> -> vector<16x8xf32>
    %21 = arith.addf %19, %20 : vector<16x8xf32>
    %22 = arith.addf %21, %16 : vector<16x8xf32>
    %cst_14 = arith.constant 0.000000e+00 : f32
    %23 = vector.broadcast %cst_14 : f32 to vector<16x8xf32>
    %24 = arith.maximumf %22, %23 : vector<16x8xf32>
    %25 = vector.extract_strided_slice %24 {offsets = [0, 0], sizes = [16, 4], strides = [1, 1]} : vector<16x8xf32> to vector<16x4xf32>
    %26 = vector.extract_strided_slice %24 {offsets = [0, 4], sizes = [16, 4], strides = [1, 1]} : vector<16x8xf32> to vector<16x4xf32>
    %27 = arith.addf %25, %26 : vector<16x4xf32>
    %c0_15 = arith.constant 0 : index
    %c0_16 = arith.constant 0 : index
    %c0_17 = arith.constant 0 : index
    %28 = vector.load %arg3[%c0_15, %c0_16, %c0_17] : memref<1x16x4xf32, #tpu.memory_space<vmem>>, vector<1x16x4xf32>
    %29 = vector.shape_cast %28 : vector<1x16x4xf32> to vector<16x4xf32>
    %30 = vector.shape_cast %27 : vector<16x4xf32> to vector<1x16x4xf32>
    tpu.vector_store %arg3[%c0_15, %c0_16, %c0_17], %30 {strides = array<i32>} : memref<1x16x4xf32, #tpu.memory_space<vmem>>, vector<1x16x4xf32>,
    return
  }
  func.func @transform_0(%arg0: i32) -> (i32, i32, i32) {
    %c0_i32 = arith.constant 0 : i32
    %c0_i32_0 = arith.constant 0 : i32
    %c0_i32_1 = arith.constant 0 : i32
    return %arg0, %c0_i32, %c0_i32_0 : i32, i32, i32
  }
  func.func @transform_1(%arg0: i32) -> (i32, i32) {
    %c0_i32 = arith.constant 0 : i32
    %c0_i32_0 = arith.constant 0 : i32
    %c0_i32_1 = arith.constant 0 : i32
    return %c0_i32, %c0_i32_0 : i32, i32
  }
  func.func @transform_2(%arg0: i32) -> (i32, i32, i32) {
    %c0_i32 = arith.constant 0 : i32
    %c0_i32_0 = arith.constant 0 : i32
    %c0_i32_1 = arith.constant 0 : i32
    return %arg0, %c0_i32, %c0_i32_0 : i32, i32, i32
  }
}

</mosaic_0001>

<llo_original>
// kernel: forward.1
$region0: #{forward.1}
  #allocation0 [shape = 'u32[]', space=smem, size = 0x4, offset = 0x4, fixed_abs, tag = 'smem constant byte address 0x4 - core index']
  #allocation1 [shape = 'u32[144,128]{1,0:T(1,128)}', space=vmem, size = 0x12000, scoped, tag = 'internal scratch']
  %s0 = inlined_call_operand.vmem [shape: bf16[8,16,33], index: 0, kind: input, shape index: {}]
  %s1 = inlined_call_operand.vmem [shape: bf16[144,128], index: 1, kind: input, shape index: {}]
  %s2 = inlined_call_operand.vmem [shape: f32[8,16,4], index: 2, kind: output, shape index: {}]
  %s3 = sld [smem:[#allocation0]]
  $region41: #{forward.1} parent=0
    _
  %s5 = ssub.s32 1, %s3
  %s6 = scalar_select 0, %s5, %s3
  loop: start=0, step=1, limit=10
  $region2: #{forward.1} parent=0 // loop_pre_header
    _
  $region3: #{forward.1} parent=0 // loop_header
    %s8 = sphi 0, %s12
    %p9 = scmp.ge.s32.totalorder %s8, 10
    %s18 = sphi 0, %s20
    %s21 = sphi 0, %s18
    %s22 = sphi 0, %s21
    %s38 = sphi 0, %s22
    %s42 = sphi 0, %s42
    %s44 = sphi 0, %s42
    %s45 = sphi 0, %s44
    %s59 = sphi 0, %s45
    %s65 = sphi 0, %s67
    %s68 = sphi 0, %s65
    %s69 = sphi 0, %s68
    %s85 = sphi 0, %s69
  $region4: #{forward.1} parent=0 // loop_header_branch
    %11 = sbr.rel (%p9) target = $region8
  $region5: #{forward.1} parent=0 // loop_body
    %s13 = ssub.s32 %s8, 1
    %s14 = ssub.s32 %s8, 2
    %s15 = sadd.s32 %s8, 1
    %s16 = ssub.s32 %s8, %s15
    %p17 = scmp.eq.s32.totalorder %s16, 0
    %s19 = sadd.s32 %s18, 1
    %s20 = scalar_select %p17, %s18, %s19
    %p23 = pneg %p17
    %p24 = scmp.eq.s32.totalorder %s8, 7
    %p25 = por %p23, %p24
    %p26 = scmp.ne.s32.totalorder %s18, %s21
    %p27 = scmp.eq.s32.totalorder %s8, 0
    %p28 = por %p26, %p27
    %p29 = scmp.ne.s32.totalorder %s18, %s21
    %p30 = scmp.eq.s32.totalorder %s13, 7
    %p31 = por %p29, %p30
    %p32 = scmp.ne.s32.totalorder %s21, %s22
    %p33 = scmp.eq.s32.totalorder %s13, 0
    %p34 = por %p32, %p33
    %p35 = scmp.ne.s32.totalorder %s21, %s22
    %p36 = scmp.eq.s32.totalorder %s14, 7
    %p37 = por %p35, %p36
    %p39 = scmp.ne.s32.totalorder %s22, %s38
    %p40 = scmp.eq.s32.totalorder %s14, 0
    %p41 = por %p39, %p40
    %s43 = sadd.s32 %s42, 1
    %p46 = scmp.eq.s32.totalorder %s8, 7
    %p47 = scmp.ne.s32.totalorder %s42, %s44
    %p48 = scmp.eq.s32.totalorder %s8, 0
    %p49 = por %p47, %p48
    %p50 = scmp.ne.s32.totalorder %s42, %s44
    %p51 = scmp.eq.s32.totalorder %s13, 7
    %p52 = por %p50, %p51
    %p53 = scmp.ne.s32.totalorder %s44, %s45
    %p54 = scmp.eq.s32.totalorder %s13, 0
    %p55 = por %p53, %p54
    %p56 = scmp.ne.s32.totalorder %s44, %s45
    %p57 = scmp.eq.s32.totalorder %s14, 7
    %p58 = por %p56, %p57
    %p60 = scmp.ne.s32.totalorder %s45, %s59
    %p61 = scmp.eq.s32.totalorder %s14, 0
    %p62 = por %p60, %p61
    %s63 = ssub.s32 %s8, %s15
    %p64 = scmp.eq.s32.totalorder %s63, 0
    %s66 = sadd.s32 %s65, 1
    %s67 = scalar_select %p64, %s65, %s66
    %p70 = pneg %p64
    %p71 = scmp.eq.s32.totalorder %s8, 7
    %p72 = por %p70, %p71
    %p73 = scmp.ne.s32.totalorder %s65, %s68
    %p74 = scmp.eq.s32.totalorder %s8, 0
    %p75 = por %p73, %p74
    %p76 = scmp.ne.s32.totalorder %s65, %s68
    %p77 = scmp.eq.s32.totalorder %s13, 7
    %p78 = por %p76, %p77
    %p79 = scmp.ne.s32.totalorder %s68, %s69
    %p80 = scmp.eq.s32.totalorder %s13, 0
    %p81 = por %p79, %p80
    %p82 = scmp.ne.s32.totalorder %s68, %s69
    %p83 = scmp.eq.s32.totalorder %s14, 7
    %p84 = por %p82, %p83
    %p86 = scmp.ne.s32.totalorder %s69, %s85
    %p87 = scmp.eq.s32.totalorder %s14, 0
    %p88 = por %p86, %p87
    %p89 = scmp.le.s32.totalorder 1, %s8
    %p90 = scmp.lt.s32.totalorder %s8, 9
    %p91 = pnand %p89, %p90
    %p92 = pneg %p91
    // Predicated region
    $region9: #{forward.1} parent=5 // pred_check
      _
    $region10: #{forward.1} parent=5 // pred_check_branch
      %94 = sbr.rel (%p91) target = $region12
    $region11: #{forward.1} parent=5 // pred_region
      %s95 = ssub.s32 %s8, 1
      // Predicated region
      $region13: #{forward.1} parent=11 // pred_check
        %p96 = pneg %p55
      $region14: #{forward.1} parent=11 // pred_check_branch
        %98 = sbr.rel (%p96) target = $region16
      $region15: #{forward.1} parent=11 // pred_region
        _
      $region16: #{forward.1} parent=11 // pred_fallthru
        _
    $region12: #{forward.1} parent=5 // pred_fallthru
      _
    %p99 = scmp.lt.s32.totalorder %s8, 8
    // Predicated region
    $region17: #{forward.1} parent=5 // pred_check
      %p100 = pneg %p99
    $region18: #{forward.1} parent=5 // pred_check_branch
      %102 = sbr.rel (%p100) target = $region20
    $region19: #{forward.1} parent=5 // pred_region
      // Predicated region
      $region21: #{forward.1} parent=19 // pred_check
        %p103 = pneg %p28
      $region22: #{forward.1} parent=19 // pred_check_branch
        %105 = sbr.rel (%p103) target = $region24
      $region23: #{forward.1} parent=19 // pred_region
        %p106 = scmp.lt.s32.totalorder %s8, 7
        %s107 = scalar_select %p106, %s8, 7
        %s108 = smul.addr %s107, 2
        %s109 = smul.addr %s108, 4
        %s110 = scalar_lea.vmem %s0, %s109
      $region24: #{forward.1} parent=19 // pred_fallthru
        _
    $region20: #{forward.1} parent=5 // pred_fallthru
      _
    %p111 = scmp.le.s32.totalorder 1, %s8
    %p112 = scmp.lt.s32.totalorder %s8, 9
    %p113 = pnand %p111, %p112
    %p114 = pneg %p113
    // Predicated region
    $region25: #{forward.1} parent=5 // pred_check
      _
    $region26: #{forward.1} parent=5 // pred_check_branch
      %116 = sbr.rel (%p113) target = $region28
    $region27: #{forward.1} parent=5 // pred_region
      %s117 = ssub.s32 %s8, 1
      %p118 = scmp.lt.s32.totalorder %s13, 7
      %s119 = scalar_select %p118, %s13, 7
      %s120 = smul.addr %s119, 2
      %s121 = smul.addr %s120, 4
      %s122 = scalar_lea.vmem %s0, %s121
      %p123 = pneg %p34
      %p124 = pneg %p31
      %p125 = pneg %p55
      %p126 = pneg %p52
      %p127 = pneg %p81
      %p128 = pneg %p78
      %p129 = scmp.lt.s32.totalorder %s13, 7
      %s130 = scalar_select %p129, %s13, 7
      %s131 = smul.addr %s130, 2
      %s132 = smul.addr %s131, 8
      %s133 = scalar_lea.vmem %s2, %s132
      %p134 = scmp.lt.s32.totalorder %s13, 7
      %s135 = scalar_select %p134, %s13, 7
      %s136 = smul.addr %s135, 2
      %s137 = smul.addr %s136, 4
      %s138 = scalar_lea.vmem %s0, %s137
      %p139 = scmp.lt.s32.totalorder %s13, 7
      %s140 = scalar_select %p139, %s13, 7
      %s141 = smul.addr %s140, 2
      %s142 = smul.addr %s141, 8
      %s143 = scalar_lea.vmem %s2, %s142
      %v145 = vld [vmem:[%s138] sm:$0xf]
      %v146 = vld [vmem:[%s138 + $0x4] sm:$0xf]
      %v147 = vld [vmem:[%s1] sm:$0xf]
      %v148 = vld [vmem:[%s1 + $0x4] sm:$0xf]
      %v149 = vld [vmem:[%s1 + $0x8] sm:$0xf]
      %v150 = vld [vmem:[%s1 + $0xc] sm:$0xf]
      %v151 = vld [vmem:[%s1 + $0x10] sm:$0xf]
      %v152 = vld [vmem:[%s1 + $0x14] sm:$0xf]
      %v153 = vld [vmem:[%s1 + $0x18] sm:$0x1]
      %v154 = vld [vmem:[%s1 + $0x20] sm:$0xf]
      %v155 = vld [vmem:[%s1 + $0x24] sm:$0xf]
      %v156 = vld [vmem:[%s1 + $0x28] sm:$0xf]
      %v157 = vld [vmem:[%s1 + $0x2c] sm:$0xf]
      %v158 = vld [vmem:[%s1 + $0x30] sm:$0x1]
      %v159 = vld [vmem:[%s1 + $0x38] sm:$0xf]
      %v160 = vld [vmem:[%s1 + $0x40] sm:$0xf]
      %v163 = vunpack.c.l.b16 %v147
      %v164 = vunpack.c.l.b16 %v148
      %v165 = vpack.c.b16 %v164, %v163
      %v168 = vunpack.c.l.b16 %v145
      %v169 = vunpack.c.l.b16 %v146
      %v170 = vpack.c.b16 %v169, %v168
      %vm172 = vcmask 130048
      %v174 = vsel %vm172, %v165, 0
      %176 = vmatprep.subr.bf16.mxu0 0
      %177 = vmatpush1.bf16.msra.mxu0 %v170
      %178 = vmatprep.subr.bf16.mxu0 0
      %179 = vmatpush1.bf16.msra.mxu0 0
      %180 = vmatprep.subr.bf16.mxu0 0
      %181 = vmatpush1.bf16.msra.mxu0 0
      %182 = vmatprep.subr.bf16.mxu0 0
      %183 = vmatpush1.bf16.msra.mxu0 0
      %184 = vmatprep.subr.bf16.mxu0 0
      %185 = vmatpush1.bf16.msra.mxu0 0
      %186 = vmatprep.subr.bf16.mxu0 0
      %187 = vmatpush1.bf16.msra.mxu0 0
      %188 = vmatprep.subr.bf16.mxu0 0
      %189 = vmatpush1.bf16.msra.mxu0 0
      %190 = vmatprep.subr.bf16.mxu0 0
      %191 = vmatpush1.bf16.msra.mxu0 0
      %192 = vmatprep.subr.bf16.mxu0 0
      %193 = vmatpush1.bf16.msra.mxu0 0
      %194 = vmatprep.subr.bf16.mxu0 0
      %195 = vmatpush1.bf16.msra.mxu0 0
      %196 = vmatprep.subr.bf16.mxu0 0
      %197 = vmatpush1.bf16.msra.mxu0 0
      %198 = vmatprep.subr.bf16.mxu0 0
      %199 = vmatpush1.bf16.msra.mxu0 0
      %200 = vmatprep.subr.bf16.mxu0 0
      %201 = vmatpush1.bf16.msra.mxu0 0
      %202 = vmatprep.subr.bf16.mxu0 0
      %203 = vmatpush1.bf16.msra.mxu0 0
      %204 = vmatprep.subr.bf16.mxu0 0
      %205 = vmatpush1.bf16.msra.mxu0 0
      %206 = vmatprep.subr.bf16.mxu0 0
      %207 = vmatpush1.bf16.msra.mxu0 0
      %208 = vmatprep.mubr.bf16.mxu0 0
      %209 = vmatmul.mubr.bf16.gmra.mrb[0].mxu0 %v174
      %v210 = vpop.f32.mrb[0].mxu0
      %v211 = vadd.f32 0.0, %v210
      %v212 = vpop.f32.mrb[0].mxu0
      %v213 = vpop.f32.mrb[0].mxu0
      %v214 = vadd.f32 0.0, %v213
      %v215 = vpop.f32.mrb[0].mxu0
      %216 = vdwg.mxu0
      %v217 = vpack.c.bf16 %v214, %v211
      %v223 = vunpack.c.l.b16 %v154
      %v224 = vunpack.c.l.b16 %v155
      %v225 = vunpack.c.l.b16 %v156
      %v226 = vunpack.c.l.b16 %v157
      %v227 = vunpack.c.l.b16 %v158
      %v228 = vpack.c.b16 %v224, %v223
      %v229 = vpack.c.b16 %v226, %v225
      %v230 = vpack.c.b16 %v227, %v227
      %vm233 = vcmask 269312
      %v235 = vsel %vm233, %v170, 0
      %vm237 = vcmask 1040384
      %v238 = vsel 0, 4294967295, 65535
      %v239 = vsel %vm237, %v238, 0
      %v241 = vand.u32 %v230, %v239
      %243 = vmatprep.subr.bf16.mxu0 0
      %244 = vmatpush1.bf16.msra.mxu0 %v228
      %245 = vmatprep.subr.bf16.mxu0 0
      %246 = vmatpush1.bf16.msra.mxu0 %v229
      %247 = vmatprep.subr.bf16.mxu0 0
      %248 = vmatpush1.bf16.msra.mxu0 %v241
      %249 = vmatprep.subr.bf16.mxu0 0
      %250 = vmatpush1.bf16.msra.mxu0 0
      %251 = vmatprep.subr.bf16.mxu0 0
      %252 = vmatpush1.bf16.msra.mxu0 0
      %253 = vmatprep.subr.bf16.mxu0 0
      %254 = vmatpush1.bf16.msra.mxu0 0
      %255 = vmatprep.subr.bf16.mxu0 0
      %256 = vmatpush1.bf16.msra.mxu0 0
      %257 = vmatprep.subr.bf16.mxu0 0
      %258 = vmatpush1.bf16.msra.mxu0 0
      %259 = vmatprep.subr.bf16.mxu0 0
      %260 = vmatpush1.bf16.msra.mxu0 0
      %261 = vmatprep.subr.bf16.mxu0 0
      %262 = vmatpush1.bf16.msra.mxu0 0
      %263 = vmatprep.subr.bf16.mxu0 0
      %264 = vmatpush1.bf16.msra.mxu0 0
      %265 = vmatprep.subr.bf16.mxu0 0
      %266 = vmatpush1.bf16.msra.mxu0 0
      %267 = vmatprep.subr.bf16.mxu0 0
      %268 = vmatpush1.bf16.msra.mxu0 0
      %269 = vmatprep.subr.bf16.mxu0 0
      %270 = vmatpush1.bf16.msra.mxu0 0
      %271 = vmatprep.subr.bf16.mxu0 0
      %272 = vmatpush1.bf16.msra.mxu0 0
      %273 = vmatprep.subr.bf16.mxu0 0
      %274 = vmatpush1.bf16.msra.mxu0 0
      %275 = vmatprep.mubr.bf16.mxu0 0
      %276 = vmatmul.mubr.bf16.gmra.mrb[0].mxu0 %v235
      %v277 = vpop.f32.mrb[0].mxu0
      %v278 = vadd.f32 0.0, %v277
      %v279 = vpop.f32.mrb[0].mxu0
      %v280 = vpop.f32.mrb[0].mxu0
      %v281 = vadd.f32 0.0, %v280
      %v282 = vpop.f32.mrb[0].mxu0
      %283 = vdwg.mxu0
      %v289 = vunpack.c.l.b16 %v149
      %v290 = vunpack.c.l.b16 %v150
      %v291 = vunpack.c.l.b16 %v151
      %v292 = vunpack.c.l.b16 %v152
      %v293 = vunpack.c.l.b16 %v153
      %v294 = vpack.c.b16 %v290, %v289
      %v295 = vpack.c.b16 %v292, %v291
      %v296 = vpack.c.b16 %v293, %v293
      %v300 = vsel %vm233, %v217, 0
      %v303 = vand.u32 %v296, %v239
      %305 = vmatprep.subr.bf16.mxu0 0
      %306 = vmatpush1.bf16.msra.mxu0 %v294
      %307 = vmatprep.subr.bf16.mxu0 0
      %308 = vmatpush1.bf16.msra.mxu0 %v295
      %309 = vmatprep.subr.bf16.mxu0 0
      %310 = vmatpush1.bf16.msra.mxu0 %v303
      %311 = vmatprep.subr.bf16.mxu0 0
      %312 = vmatpush1.bf16.msra.mxu0 0
      %313 = vmatprep.subr.bf16.mxu0 0
      %314 = vmatpush1.bf16.msra.mxu0 0
      %315 = vmatprep.subr.bf16.mxu0 0
      %316 = vmatpush1.bf16.msra.mxu0 0
      %317 = vmatprep.subr.bf16.mxu0 0
      %318 = vmatpush1.bf16.msra.mxu0 0
      %319 = vmatprep.subr.bf16.mxu0 0
      %320 = vmatpush1.bf16.msra.mxu0 0
      %321 = vmatprep.subr.bf16.mxu0 0
      %322 = vmatpush1.bf16.msra.mxu0 0
      %323 = vmatprep.subr.bf16.mxu0 0
      %324 = vmatpush1.bf16.msra.mxu0 0
      %325 = vmatprep.subr.bf16.mxu0 0
      %326 = vmatpush1.bf16.msra.mxu0 0
      %327 = vmatprep.subr.bf16.mxu0 0
      %328 = vmatpush1.bf16.msra.mxu0 0
      %329 = vmatprep.subr.bf16.mxu0 0
      %330 = vmatpush1.bf16.msra.mxu0 0
      %331 = vmatprep.subr.bf16.mxu0 0
      %332 = vmatpush1.bf16.msra.mxu0 0
      %333 = vmatprep.subr.bf16.mxu0 0
      %334 = vmatpush1.bf16.msra.mxu0 0
      %335 = vmatprep.subr.bf16.mxu0 0
      %336 = vmatpush1.bf16.msra.mxu0 0
      %337 = vmatprep.mubr.bf16.mxu0 0
      %338 = vmatmul.mubr.bf16.gmra.mrb[0].mxu0 %v300
      %v339 = vpop.f32.mrb[0].mxu0
      %v340 = vadd.f32 %v278, %v339
      %v341 = vpop.f32.mrb[0].mxu0
      %v342 = vpop.f32.mrb[0].mxu0
      %v343 = vadd.f32 %v281, %v342
      %v344 = vpop.f32.mrb[0].mxu0
      %345 = vdwg.mxu0
      %v346 = vmax.f32 %v340, 0.0
      %v347 = vmax.f32 %v343, 0.0
      %v348 = vpack.c.bf16 %v347, %v346
      %349 = vmatprep.subr.bf16.mxu0 0
      %350 = vmatpush1.bf16.msra.mxu0 %v348
      %351 = vmatprep.subr.bf16.mxu0 0
      %352 = vmatpush1.bf16.msra.mxu0 0
      %353 = vmatprep.subr.bf16.mxu0 0
      %354 = vmatpush1.bf16.msra.mxu0 0
      %355 = vmatprep.subr.bf16.mxu0 0
      %356 = vmatpush1.bf16.msra.mxu0 0
      %357 = vmatprep.subr.bf16.mxu0 0
      %358 = vmatpush1.bf16.msra.mxu0 0
      %359 = vmatprep.subr.bf16.mxu0 0
      %360 = vmatpush1.bf16.msra.mxu0 0
      %361 = vmatprep.subr.bf16.mxu0 0
      %362 = vmatpush1.bf16.msra.mxu0 0
      %363 = vmatprep.subr.bf16.mxu0 0
      %364 = vmatpush1.bf16.msra.mxu0 0
      %365 = vmatprep.subr.bf16.mxu0 0
      %366 = vmatpush1.bf16.msra.mxu0 0
      %367 = vmatprep.subr.bf16.mxu0 0
      %368 = vmatpush1.bf16.msra.mxu0 0
      %369 = vmatprep.subr.bf16.mxu0 0
      %370 = vmatpush1.bf16.msra.mxu0 0
      %371 = vmatprep.subr.bf16.mxu0 0
      %372 = vmatpush1.bf16.msra.mxu0 0
      %373 = vmatprep.subr.bf16.mxu0 0
      %374 = vmatpush1.bf16.msra.mxu0 0
      %375 = vmatprep.subr.bf16.mxu0 0
      %376 = vmatpush1.bf16.msra.mxu0 0
      %377 = vmatprep.subr.bf16.mxu0 0
      %378 = vmatpush1.bf16.msra.mxu0 0
      %379 = vmatprep.subr.bf16.mxu0 0
      %380 = vmatpush1.bf16.msra.mxu0 0
      %381 = vmatprep.mubr.bf16.mxu0 0
      %382 = vmatmul.mubr.bf16.gmra.mrb[0].mxu0 %v174
      %v383 = vpop.f32.mrb[0].mxu0
      %v384 = vadd.f32 0.0, %v383
      %v385 = vpop.f32.mrb[0].mxu0
      %v386 = vpop.f32.mrb[0].mxu0
      %v387 = vadd.f32 0.0, %v386
      %v388 = vpop.f32.mrb[0].mxu0
      %389 = vdwg.mxu0
      %v390 = vpack.c.bf16 %v387, %v384
      %vm391 = vcmask 64512
      %v393 = vsel %vm391, %v348, 0
      %vm395 = vcmask 1043456
      %v397 = vsel %vm395, %v160, 0
      %399 = vmatprep.subr.bf16.mxu0 0
      %400 = vmatpush1.bf16.msra.mxu0 %v397
      %401 = vmatprep.subr.bf16.mxu0 0
      %402 = vmatpush1.bf16.msra.mxu0 0
      %403 = vmatprep.subr.bf16.mxu0 0
      %404 = vmatpush1.bf16.msra.mxu0 0
      %405 = vmatprep.subr.bf16.mxu0 0
      %406 = vmatpush1.bf16.msra.mxu0 0
      %407 = vmatprep.subr.bf16.mxu0 0
      %408 = vmatpush1.bf16.msra.mxu0 0
      %409 = vmatprep.subr.bf16.mxu0 0
      %410 = vmatpush1.bf16.msra.mxu0 0
      %411 = vmatprep.subr.bf16.mxu0 0
      %412 = vmatpush1.bf16.msra.mxu0 0
      %413 = vmatprep.subr.bf16.mxu0 0
      %414 = vmatpush1.bf16.msra.mxu0 0
      %415 = vmatprep.subr.bf16.mxu0 0
      %416 = vmatpush1.bf16.msra.mxu0 0
      %417 = vmatprep.subr.bf16.mxu0 0
      %418 = vmatpush1.bf16.msra.mxu0 0
      %419 = vmatprep.subr.bf16.mxu0 0
      %420 = vmatpush1.bf16.msra.mxu0 0
      %421 = vmatprep.subr.bf16.mxu0 0
      %422 = vmatpush1.bf16.msra.mxu0 0
      %423 = vmatprep.subr.bf16.mxu0 0
      %424 = vmatpush1.bf16.msra.mxu0 0
      %425 = vmatprep.subr.bf16.mxu0 0
      %426 = vmatpush1.bf16.msra.mxu0 0
      %427 = vmatprep.subr.bf16.mxu0 0
      %428 = vmatpush1.bf16.msra.mxu0 0
      %429 = vmatprep.subr.bf16.mxu0 0
      %430 = vmatpush1.bf16.msra.mxu0 0
      %431 = vmatprep.mubr.bf16.mxu0 0
      %432 = vmatmul.mubr.bf16.gmra.mrb[0].mxu0 %v393
      %v433 = vpop.f32.mrb[0].mxu0
      %v434 = vadd.f32 0.0, %v433
      %v435 = vpop.f32.mrb[0].mxu0
      %v436 = vpop.f32.mrb[0].mxu0
      %v437 = vadd.f32 0.0, %v436
      %v438 = vpop.f32.mrb[0].mxu0
      %439 = vdwg.mxu0
      %v441 = vsel %vm391, %v390, 0
      %v444 = vsel %vm395, %v159, 0
      %446 = vmatprep.subr.bf16.mxu0 0
      %447 = vmatpush1.bf16.msra.mxu0 %v444
      %448 = vmatprep.subr.bf16.mxu0 0
      %449 = vmatpush1.bf16.msra.mxu0 0
      %450 = vmatprep.subr.bf16.mxu0 0
      %451 = vmatpush1.bf16.msra.mxu0 0
      %452 = vmatprep.subr.bf16.mxu0 0
      %453 = vmatpush1.bf16.msra.mxu0 0
      %454 = vmatprep.subr.bf16.mxu0 0
      %455 = vmatpush1.bf16.msra.mxu0 0
      %456 = vmatprep.subr.bf16.mxu0 0
      %457 = vmatpush1.bf16.msra.mxu0 0
      %458 = vmatprep.subr.bf16.mxu0 0
      %459 = vmatpush1.bf16.msra.mxu0 0
      %460 = vmatprep.subr.bf16.mxu0 0
      %461 = vmatpush1.bf16.msra.mxu0 0
      %462 = vmatprep.subr.bf16.mxu0 0
      %463 = vmatpush1.bf16.msra.mxu0 0
      %464 = vmatprep.subr.bf16.mxu0 0
      %465 = vmatpush1.bf16.msra.mxu0 0
      %466 = vmatprep.subr.bf16.mxu0 0
      %467 = vmatpush1.bf16.msra.mxu0 0
      %468 = vmatprep.subr.bf16.mxu0 0
      %469 = vmatpush1.bf16.msra.mxu0 0
      %470 = vmatprep.subr.bf16.mxu0 0
      %471 = vmatpush1.bf16.msra.mxu0 0
      %472 = vmatprep.subr.bf16.mxu0 0
      %473 = vmatpush1.bf16.msra.mxu0 0
      %474 = vmatprep.subr.bf16.mxu0 0
      %475 = vmatpush1.bf16.msra.mxu0 0
      %476 = vmatprep.subr.bf16.mxu0 0
      %477 = vmatpush1.bf16.msra.mxu0 0
      %478 = vmatprep.mubr.bf16.mxu0 0
      %479 = vmatmul.mubr.bf16.gmra.mrb[0].mxu0 %v441
      %v480 = vpop.f32.mrb[0].mxu0
      %v481 = vadd.f32 %v434, %v480
      %v482 = vpop.f32.mrb[0].mxu0
      %v483 = vpop.f32.mrb[0].mxu0
      %v484 = vadd.f32 %v437, %v483
      %v485 = vpop.f32.mrb[0].mxu0
      %486 = vdwg.mxu0
      %489 = vrot.lane.b32.xlu0 %v340, 120
      %v490 = vpop.permute.xlu0 %489
      %491 = vrot.lane.b32.xlu0 %v343, 120
      %v492 = vpop.permute.xlu0 %491
      %v495 = vadd.f32 %v481, %v490
      %v496 = vadd.f32 %v484, %v492
      %v497 = vmax.f32 %v495, 0.0
      %v498 = vmax.f32 %v496, 0.0
      %501 = vrot.lane.b32.xlu0 %v497, 124
      %v502 = vpop.permute.xlu0 %501
      %503 = vrot.lane.b32.xlu0 %v498, 124
      %v504 = vpop.permute.xlu0 %503
      %v507 = vadd.f32 %v497, %v502
      %v508 = vadd.f32 %v498, %v504
      %vm509 = vcmask 31744
      %510 = vst.msk [vmem:[%s143] sm:$0xff] %vm509, %v507
      %511 = vst.msk [vmem:[%s143 + $0x8] sm:$0xff] %vm509, %v508
      %p512 = scmp.lt.s32.totalorder %s13, 7
      %s513 = scalar_select %p512, %s13, 7
      %s514 = smul.addr %s513, 2
      %s515 = smul.addr %s514, 8
      %s516 = scalar_lea.vmem %s2, %s515
      // Predicated region
      $region29: #{forward.1} parent=27 // pred_check
        %p517 = pneg %p78
      $region30: #{forward.1} parent=27 // pred_check_branch
        %519 = sbr.rel (%p517) target = $region32
      $region31: #{forward.1} parent=27 // pred_region
        _
      $region32: #{forward.1} parent=27 // pred_fallthru
        _
    $region28: #{forward.1} parent=5 // pred_fallthru
      _
    %p520 = scmp.le.s32.totalorder 2, %s8
    // Predicated region
    $region33: #{forward.1} parent=5 // pred_check
      %p521 = pneg %p520
    $region34: #{forward.1} parent=5 // pred_check_branch
      %523 = sbr.rel (%p521) target = $region36
    $region35: #{forward.1} parent=5 // pred_region
      %s524 = ssub.s32 %s8, 2
      // Predicated region
      $region37: #{forward.1} parent=35 // pred_check
        %p525 = pneg %p84
      $region38: #{forward.1} parent=35 // pred_check_branch
        %527 = sbr.rel (%p525) target = $region40
      $region39: #{forward.1} parent=35 // pred_region
        %p528 = scmp.lt.s32.totalorder %s14, 7
        %s529 = scalar_select %p528, %s14, 7
        %s530 = smul.addr %s529, 2
        %s531 = smul.addr %s530, 8
        %s532 = scalar_lea.vmem %s2, %s531
      $region40: #{forward.1} parent=35 // pred_fallthru
        _
    $region36: #{forward.1} parent=5 // pred_fallthru
      _
  $region6: #{forward.1} parent=0 // loop_footer
    %s12 = sadd.s32 1, %s8
  $region7: #{forward.1} parent=0 // loop_footer_branch
    %7 = sbr.rel target = $region3
  $region8: #{forward.1} parent=0 // loop_exit
    _

</llo_original>
